<compile_context>
chip_gen: v5e
topology: v5e:2x2
jax: 0.10.0
libtpu: 0.0.40
codegen_flags: <defaults>
</compile_context>

<pallas_src>
import functools

import numpy as np

import jax
import jax.numpy as jnp
from jax.experimental import pallas as pl
from jax.experimental.pallas import tpu as pltpu


def _round_up(x, m):
    return (x + m - 1) // m * m


def _vmem_budget_bytes():
    """(capacity, tile budget) -- generation aware, conservative fallback."""
    try:
        cap = int(pltpu.get_tpu_info().vmem_capacity_bytes)
    except Exception:
        cap = 64 * 1024 * 1024  # assume the smallest (v7x-sized) VMEM
    budget = min(cap // 2, 64 * 1024 * 1024)  # v7x: 32 MiB, v5e/v6e: 64 MiB
    return cap, budget


def _moving_avg_kernel(a_ref, x_ref, o_ref, acc_ref, *, inv_k):
    # a_ref:  (S, T)    band-matrix column block (exact 0/1 weights).
    # x_ref:  (M_t, S)  slice of the transposed, replicate+zero padded input.
    # o_ref:  (M_t, T)  output tile, T (multiple of 128) on the lane axis.
    # acc_ref:(M_t, T)  f32 accumulator, resident across the band axis.
    @pl.when(pl.program_id(2) == 0)
    def _init():
        acc_ref[...] = jnp.zeros_like(acc_ref)

    acc_ref[...] += jnp.dot(
        x_ref[...],
        a_ref[...],
        preferred_element_type=jnp.float32,
        precision=jax.lax.Precision.HIGHEST,
    )

    @pl.when(pl.program_id(2) == pl.num_programs(2) - 1)
    def _finalize():
        o_ref[...] = (acc_ref[...] * inv_k).astype(o_ref.dtype)


def moving_avg(x, kernel_size, stride):
    """x: (B, L, C) float array.  Returns (B, L_out, C)."""
    B, L, C = x.shape
    K = int(kernel_size)
    stride = int(stride)
    pad = (K - 1) // 2
    L_padded = L + 2 * pad
    assert L_padded >= K, "sequence too short for this kernel_size"
    L_out = (L_padded - K) // stride + 1

    M = B * C
    itemsize = x.dtype.itemsize
    sub = max(8, 8 * (4 // itemsize))  # sublane granularity per dtype

    cap, budget = _vmem_budget_bytes()

    # ---- tiling -----------------------------------------------------------
    S = 128                                              # band column block
    T = 128 if (L_out <= 128 or stride > 1) else 256     # output lane tile
    n_t = _round_up(L_out, T) // T
    L_out_pad = n_t * T
    Wb = _round_up((T - 1) * stride + K, S)              # per-tile band width
    nb = Wb // S
    step = (T * stride) // S          # x column-block step per output tile

    def _usage(mt):  # double-buffered blocks for all operands + f32 scratch
        return 2 * (S * T + mt * S + mt * T) * itemsize + mt * T * 4

    margin = 4 * 1024 * 1024
    m_ceil = _round_up(M, sub)
    cands = [c for c in (8192, 4096, 2048, 1024, 512, 256, 128, 64, 32, 16, 8)
             if c % sub == 0 and c <= m_ceil]
    if not cands:
        cands = [sub]
    M_t = next((c for c in cands if _usage(c) + margin <= budget), cands[-1])
    # v7x has two TensorCores: keep at least 2 independent "parallel" steps.
    if n_t == 1 and m_ceil > sub and M_t >= m_ceil:
        M_t = max(sub, _round_up((m_ceil + 1) // 2, sub))
    M_pad = _round_up(M, M_t)
    n_m = M_pad // M_t

    L_src = (n_t - 1) * T * stride + Wb   # aligned padded time extent (mult of 128)

    # ---- wrapper-side layout plumbing (transpose + replicate/zero pad) ----
    xt = jnp.transpose(x, (0, 2, 1)).reshape(M, L)
    if pad > 0:
        xp = jnp.concatenate(
            [jnp.repeat(xt[:, :1], pad, axis=1),
             xt,
             jnp.repeat(xt[:, -1:], pad, axis=1)],
            axis=1,
        )
    else:
        xp = xt
    xp = xp[:, : min(L_padded, L_src)]
    xp = jnp.pad(xp, ((0, M_pad - M), (0, L_src - xp.shape[1])))

    # Band matrix is IDENTICAL for every output tile because tile n's band
    # starts exactly at padded column n*T*stride:  band[q, t] = 1 iff
    # t*stride <= q < t*stride + K.  Exact 0/1 values in any float dtype.
    q = np.arange(Wb)[:, None]
    t = np.arange(T)[None, :]
    band = ((q >= t * stride) & (q < t * stride + K)).astype(np.float32)
    a_band = jnp.asarray(band, dtype=x.dtype)

    kernel = functools.partial(_moving_avg_kernel, inv_k=1.0 / K)

    cost = pl.CostEstimate(
        flops=int(2 * M_pad * L_out_pad * Wb),
        transcendentals=0,
        bytes_accessed=int((M_pad * n_t * Wb + M_pad * L_out_pad
                            + n_m * n_t * Wb * T) * itemsize),
    )

    vmem_limit = int(min(cap, max(_usage(M_t) + 16 * 1024 * 1024,
                                  32 * 1024 * 1024)))

    out_t = pl.pallas_call(
        kernel,
        out_shape=jax.ShapeDtypeStruct((M_pad, L_out_pad), x.dtype),
        grid=(n_m, n_t, nb),
        in_specs=[
            # (S, T) band-matrix block: depends only on the band step ki.
            pl.BlockSpec((S, T), lambda mi, ni, ki: (ki, 0)),
            # (M_t, S) x block: band of output tile ni, column block ki.
            pl.BlockSpec((M_t, S), lambda mi, ni, ki: (mi, ni * step + ki)),
        ],
        out_specs=pl.BlockSpec((M_t, T), lambda mi, ni, ki: (mi, ni)),
        scratch_shapes=[pltpu.VMEM((M_t, T), jnp.float32)],
        compiler_params=pltpu.CompilerParams(
            dimension_semantics=("parallel", "parallel", "arbitrary"),
            vmem_limit_bytes=vmem_limit,
        ),
        cost_estimate=cost,
    )(a_band, xp)

    out = out_t[:M, :L_out].reshape(B, C, L_out)
    return jnp.transpose(out, (0, 2, 1))


def _reference_moving_avg(x, kernel_size, stride):
    # Pure-JAX reference (mirrors the PyTorch module).
    pad = (kernel_size - 1) // 2
    front = jnp.repeat(x[:, :1, :], pad, axis=1)
    end = jnp.repeat(x[:, -1:, :], pad, axis=1)
    xp = jnp.concatenate([front, x, end], axis=1)
    L_pad = xp.shape[1]
    L_out = (L_pad - kernel_size) // stride + 1
    windows = [
        xp[:, k : k + (L_out - 1) * stride + 1 : stride, :]
        for k in range(kernel_size)
    ]
    return sum(windows) / kernel_size


if __name__ == "__main__":
    key = jax.random.PRNGKey(0)
    configs = [
        # (B, L, C, kernel_size, stride)
        (2, 8, 32, 5, 1),    # odd kernel, stride 1
        (2, 8, 32, 4, 2),    # even kernel, stride 2
        (2, 16, 7, 25, 1),   # small channel count (series-decomposition case)
    ]
    for i, (B, L, C, K, s) in enumerate(configs):
        kx = jax.random.fold_in(key, i)
        x = jax.random.normal(kx, (B, L, C), dtype=jnp.float32)
        out = jax.block_until_ready(moving_avg(x, K, s))
        ref = _reference_moving_avg(x, K, s)
        assert out.shape == ref.shape, (out.shape, ref.shape)
        err = float(jnp.max(jnp.abs(out - ref)))
        assert err < 1e-5, (K, s, err)
    print("KERNEL_OK")
</pallas_src>

<mosaic_0001>
module attributes {stable_mosaic.version = 11 : i64} {
  func.func @_moving_avg_kernel(%arg0: i32, %arg1: i32, %arg2: i32, %arg3: memref<128x128xf32, #tpu.memory_space<vmem>>, %arg4: memref<32x128xf32, #tpu.memory_space<vmem>>, %arg5: memref<32x128xf32, #tpu.memory_space<vmem>>, %arg6: memref<32x128xf32, #tpu.memory_space<vmem>>) attributes {dimension_semantics = [#tpu.dimension_semantics<parallel>, #tpu.dimension_semantics<parallel>, #tpu.dimension_semantics<arbitrary>], iteration_bounds = array<i64: 2, 1, 2>, scalar_prefetch = 0 : i64, scratch_operands = 1 : i64, tpu.core_type = #tpu.core_type<tc>, window_params = [{transform_indices = @transform_0, window_bounds = array<i64: 128, 128>}, {transform_indices = @transform_1, window_bounds = array<i64: 32, 128>}, {transform_indices = @transform_2, window_bounds = array<i64: 32, 128>}]} {
    %c0_i32 = arith.constant 0 : i32
    %0 = arith.cmpi eq, %arg2, %c0_i32 : i32
    %1 = arith.extui %0 : i1 to i32
    %c0_i32_0 = arith.constant 0 : i32
    %2 = arith.cmpi ne, %1, %c0_i32_0 : i32
    scf.if %2 {
      %cst_9 = arith.constant 0.000000e+00 : f32
      %12 = vector.broadcast %cst_9 : f32 to vector<32x128xf32>
      %c0_10 = arith.constant 0 : index
      %c0_11 = arith.constant 0 : index
      %13 = vector.load %arg6[%c0_10, %c0_11] : memref<32x128xf32, #tpu.memory_space<vmem>>, vector<32x128xf32>
      tpu.vector_store %arg6[%c0_10, %c0_11], %12 {strides = array<i32>} : memref<32x128xf32, #tpu.memory_space<vmem>>, vector<32x128xf32>,
    } else {
    }
    %c0 = arith.constant 0 : index
    %c0_1 = arith.constant 0 : index
    %3 = vector.load %arg6[%c0, %c0_1] : memref<32x128xf32, #tpu.memory_space<vmem>>, vector<32x128xf32>
    %c0_2 = arith.constant 0 : index
    %c0_3 = arith.constant 0 : index
    %4 = vector.load %arg4[%c0_2, %c0_3] : memref<32x128xf32, #tpu.memory_space<vmem>>, vector<32x128xf32>
    %c0_4 = arith.constant 0 : index
    %c0_5 = arith.constant 0 : index
    %5 = vector.load %arg3[%c0_4, %c0_5] : memref<128x128xf32, #tpu.memory_space<vmem>>, vector<128x128xf32>
    %cst = arith.constant dense<0.000000e+00> : vector<32x128xf32>
    %6 = tpu.matmul %4, %5, %cst {dimension_numbers = #tpu.dot_dimension_numbers<[1], [0], [0], [1], [0, 0, 1, 1], [], []>, precision = #tpu.contract_precision<fp32>} : vector<32x128xf32>, vector<128x128xf32>, vector<32x128xf32> -> vector<32x128xf32>
    %7 = arith.addf %3, %6 : vector<32x128xf32>
    %c0_6 = arith.constant 0 : index
    %c0_7 = arith.constant 0 : index
    %8 = vector.load %arg6[%c0_6, %c0_7] : memref<32x128xf32, #tpu.memory_space<vmem>>, vector<32x128xf32>
    tpu.vector_store %arg6[%c0_6, %c0_7], %7 {strides = array<i32>} : memref<32x128xf32, #tpu.memory_space<vmem>>, vector<32x128xf32>,
    %c1_i32 = arith.constant 1 : i32
    %9 = arith.cmpi eq, %arg2, %c1_i32 : i32
    %10 = arith.extui %9 : i1 to i32
    %c0_i32_8 = arith.constant 0 : i32
    %11 = arith.cmpi ne, %10, %c0_i32_8 : i32
    scf.if %11 {
      %c0_9 = arith.constant 0 : index
      %c0_10 = arith.constant 0 : index
      %12 = vector.load %arg6[%c0_9, %c0_10] : memref<32x128xf32, #tpu.memory_space<vmem>>, vector<32x128xf32>
      %cst_11 = arith.constant 2.000000e-01 : f32
      %13 = vector.broadcast %cst_11 : f32 to vector<32x128xf32>
      %14 = arith.mulf %12, %13 : vector<32x128xf32>
      %c0_12 = arith.constant 0 : index
      %c0_13 = arith.constant 0 : index
      %15 = vector.load %arg5[%c0_12, %c0_13] : memref<32x128xf32, #tpu.memory_space<vmem>>, vector<32x128xf32>
      tpu.vector_store %arg5[%c0_12, %c0_13], %14 {strides = array<i32>} : memref<32x128xf32, #tpu.memory_space<vmem>>, vector<32x128xf32>,
    } else {
    }
    return
  }
  func.func @transform_0(%arg0: i32, %arg1: i32, %arg2: i32) -> (i32, i32) {
    %c0_i32 = arith.constant 0 : i32
    %c0_i32_0 = arith.constant 0 : i32
    return %arg2, %c0_i32 : i32, i32
  }
  func.func @transform_1(%arg0: i32, %arg1: i32, %arg2: i32) -> (i32, i32) {
    %c1_i32 = arith.constant 1 : i32
    %0 = arith.muli %arg1, %c1_i32 : i32
    %1 = arith.addi %0, %arg2 : i32
    %c0_i32 = arith.constant 0 : i32
    return %arg0, %1 : i32, i32
  }
  func.func @transform_2(%arg0: i32, %arg1: i32, %arg2: i32) -> (i32, i32) {
    %c0_i32 = arith.constant 0 : i32
    return %arg0, %arg1 : i32, i32
  }
}

</mosaic_0001>

<llo_original>
// kernel: tpu_custom_call.1
$region0: #{tpu_custom_call.1}
  #allocation0 [shape = 'u32[]', space=smem, size = 0x4, offset = 0x4, fixed_abs, tag = 'smem constant byte address 0x4 - core index']
  #allocation1 [shape = 'u32[72,128]{1,0:T(1,128)}', space=vmem, size = 0x9000, scoped, tag = 'internal scratch']
  #allocation2 [shape = 'f32[32,128]{1,0:T(8,128)}', space=vmem, size = 0x4000, scoped, tag = 'scratch operand']
  %s0 = inlined_call_operand.hbm [shape: f32[256,128], index: 0, kind: input, shape index: {}]
  %s1 = inlined_call_operand.hbm [shape: f32[64,256], index: 1, kind: input, shape index: {}]
  %s2 = inlined_call_operand.hbm [shape: f32[64,128], index: 2, kind: output, shape index: {}]
  %s3 = sld [smem:[#allocation0]]
  $region57: #{tpu_custom_call.1} parent=0
    _
  %s5 = ssub.s32 1, %s3
  %s6 = scalar_select 0, %s5, %s3
  $region1: #{tpu_custom_call.1} parent=0
    #allocation3 [shape = 'u8[131072]{0}', space=vmem, size = 0x20000, scoped, tag = 'input window, operand 0']
    #allocation4 [shape = 's32[2]{0}', space=sflag, size = 0x8, scoped, tag = 'scoped memory for tpu_custom_call.1']
    #allocation5 [shape = 's32[2]{0}', space=sflag, size = 0x8, scoped, tag = 'scoped memory for tpu_custom_call.1']
    #allocation6 [shape = 'u8[32768]{0}', space=vmem, size = 0x8000, scoped, tag = 'input window, operand 1']
    #allocation7 [shape = 's32[2]{0}', space=sflag, size = 0x8, scoped, tag = 'scoped memory for tpu_custom_call.1']
    #allocation8 [shape = 'u8[32768]{0}', space=vmem, size = 0x8000, scoped, tag = 'output window, operand 0']
    %7 = vsyncpa [#allocation4], 0
    %s8 = scalar_lea.sflag [#allocation4], 1
    %9 = vsyncpa %s8, 0
    %10 = vsyncpa [#allocation7], 0
    %s11 = scalar_lea.sflag [#allocation7], 1
    %12 = vsyncpa %s11, 0
    %13 = vsyncpa [#allocation5], 0
    %s14 = scalar_lea.sflag [#allocation5], 1
    %15 = vsyncpa %s14, 0
    loop: start=0, step=1, limit=6
    $region2: #{tpu_custom_call.1} parent=1 // loop_pre_header
      _
    $region3: #{tpu_custom_call.1} parent=1 // loop_header
      %s17 = sphi 0, %s21
      %p18 = scmp.ge.s32.totalorder %s17, 6
      %s24 = sphi 0, %s43
      %s25 = sphi 0, %s39
      %s26 = sphi 0, %s35
      %s27 = sphi 0, %s24
      %s28 = sphi 0, %s25
      %s29 = sphi 0, %s26
      %s30 = sphi 0, %s27
      %s31 = sphi 0, %s28
      %s32 = sphi 0, %s29
      %s46 = sphi 0, %s48
      %s49 = sphi 0, %s46
      %s50 = sphi 0, %s49
      %s66 = sphi 0, %s50
      %s76 = sphi 0, %s78
      %s79 = sphi 0, %s76
      %s80 = sphi 0, %s79
      %s96 = sphi 0, %s80
      %s104 = sphi 0, %s106
      %s107 = sphi 0, %s104
      %s108 = sphi 0, %s107
      %s124 = sphi 0, %s108
    $region4: #{tpu_custom_call.1} parent=1 // loop_header_branch
      %20 = sbr.rel (%p18) target = $region8
    $region5: #{tpu_custom_call.1} parent=1 // loop_body
      %s22 = ssub.s32 %s17, 1
      %s23 = ssub.s32 %s17, 2
      %s33 = sadd.s32 1, %s26
      %p34 = scmp.ge.s32.totalorder %s33, 2
      %s35 = scalar_select %p34, 0, %s33
      %s36 = sadd.s32 1, %s25
      %s37 = scalar_select %p34, %s36, %s25
      %p38 = scmp.ge.s32.totalorder %s37, 1
      %s39 = scalar_select %p38, 0, %s37
      %s40 = sadd.s32 1, %s24
      %s41 = scalar_select %p38, %s40, %s24
      %p42 = scmp.ge.s32.totalorder %s41, 2
      %s43 = scalar_select %p42, 0, %s41
      %s44 = ssub.s32 %s26, %s35
      %p45 = scmp.eq.s32.totalorder %s44, 0
      %s47 = sadd.s32 %s46, 1
      %s48 = scalar_select %p45, %s46, %s47
      %p51 = pneg %p45
      %p52 = scmp.eq.s32.totalorder %s17, 3
      %p53 = por %p51, %p52
      %p54 = scmp.ne.s32.totalorder %s46, %s49
      %p55 = scmp.eq.s32.totalorder %s17, 0
      %p56 = por %p54, %p55
      %p57 = scmp.ne.s32.totalorder %s46, %s49
      %p58 = scmp.eq.s32.totalorder %s22, 3
      %p59 = por %p57, %p58
      %p60 = scmp.ne.s32.totalorder %s49, %s50
      %p61 = scmp.eq.s32.totalorder %s22, 0
      %p62 = por %p60, %p61
      %p63 = scmp.ne.s32.totalorder %s49, %s50
      %p64 = scmp.eq.s32.totalorder %s23, 3
      %p65 = por %p63, %p64
      %p67 = scmp.ne.s32.totalorder %s50, %s66
      %p68 = scmp.eq.s32.totalorder %s23, 0
      %p69 = por %p67, %p68
      %s70 = sadd.s32 %s25, %s26
      %s71 = sadd.s32 %s39, %s35
      %s72 = ssub.s32 %s24, %s43
      %s73 = ssub.s32 %s70, %s71
      %s74 = sor.u32 %s72, %s73
      %p75 = scmp.eq.s32.totalorder %s74, 0
      %s77 = sadd.s32 %s76, 1
      %s78 = scalar_select %p75, %s76, %s77
      %p81 = pneg %p75
      %p82 = scmp.eq.s32.totalorder %s17, 3
      %p83 = por %p81, %p82
      %p84 = scmp.ne.s32.totalorder %s76, %s79
      %p85 = scmp.eq.s32.totalorder %s17, 0
      %p86 = por %p84, %p85
      %p87 = scmp.ne.s32.totalorder %s76, %s79
      %p88 = scmp.eq.s32.totalorder %s22, 3
      %p89 = por %p87, %p88
      %p90 = scmp.ne.s32.totalorder %s79, %s80
      %p91 = scmp.eq.s32.totalorder %s22, 0
      %p92 = por %p90, %p91
      %p93 = scmp.ne.s32.totalorder %s79, %s80
      %p94 = scmp.eq.s32.totalorder %s23, 3
      %p95 = por %p93, %p94
      %p97 = scmp.ne.s32.totalorder %s80, %s96
      %p98 = scmp.eq.s32.totalorder %s23, 0
      %p99 = por %p97, %p98
      %s100 = ssub.s32 %s24, %s43
      %s101 = ssub.s32 %s25, %s39
      %s102 = sor.u32 %s100, %s101
      %p103 = scmp.eq.s32.totalorder %s102, 0
      %s105 = sadd.s32 %s104, 1
      %s106 = scalar_select %p103, %s104, %s105
      %p109 = pneg %p103
      %p110 = scmp.eq.s32.totalorder %s17, 3
      %p111 = por %p109, %p110
      %p112 = scmp.ne.s32.totalorder %s104, %s107
      %p113 = scmp.eq.s32.totalorder %s17, 0
      %p114 = por %p112, %p113
      %p115 = scmp.ne.s32.totalorder %s104, %s107
      %p116 = scmp.eq.s32.totalorder %s22, 3
      %p117 = por %p115, %p116
      %p118 = scmp.ne.s32.totalorder %s107, %s108
      %p119 = scmp.eq.s32.totalorder %s22, 0
      %p120 = por %p118, %p119
      %p121 = scmp.ne.s32.totalorder %s107, %s108
      %p122 = scmp.eq.s32.totalorder %s23, 3
      %p123 = por %p121, %p122
      %p125 = scmp.ne.s32.totalorder %s108, %s124
      %p126 = scmp.eq.s32.totalorder %s23, 0
      %p127 = por %p125, %p126
      %p128 = scmp.le.s32.totalorder 1, %s17
      %p129 = scmp.lt.s32.totalorder %s17, 5
      %p130 = pnand %p128, %p129
      %p131 = pneg %p130
      // Predicated region
      $region9: #{tpu_custom_call.1} parent=5 // pred_check
        _
      $region10: #{tpu_custom_call.1} parent=5 // pred_check_branch
        %133 = sbr.rel (%p130) target = $region12
      $region11: #{tpu_custom_call.1} parent=5 // pred_region
        %s134 = ssub.s32 %s17, 1
      $region12: #{tpu_custom_call.1} parent=5 // pred_fallthru
        _
      %p135 = scmp.lt.s32.totalorder %s17, 4
      // Predicated region
      $region13: #{tpu_custom_call.1} parent=5 // pred_check
        %p136 = pneg %p135
      $region14: #{tpu_custom_call.1} parent=5 // pred_check_branch
        %138 = sbr.rel (%p136) target = $region16
      $region15: #{tpu_custom_call.1} parent=5 // pred_region
        // Predicated region
        $region17: #{tpu_custom_call.1} parent=15 // pred_check
          %p139 = pneg %p56
        $region18: #{tpu_custom_call.1} parent=15 // pred_check_branch
          %141 = sbr.rel (%p139) target = $region20
        $region19: #{tpu_custom_call.1} parent=15 // pred_region
          %s142 = sand.u32 %s46, 1
          %s143 = scalar_lea.sflag [#allocation4], %s142
          %s144 = sand.u32 %s46, 1
          %s145 = smul.addr %s144, 128
          %s146 = scalar_lea.vmem [#allocation3], %s145
          %s147 = smul.u32 16, %s26
          %149 = vsyncadd %s143, 0
          %s150 = smul.addr %s147, 8
          %s151 = scalar_lea.hbm %s0, %s150
          %s152 = sshll.u32 %s151, 4
          %s153 = int_to_ptr.hbm [resolvable:$true] %s152
          %s154 = sshll.u32 %s146, 4
          %s155 = int_to_ptr.vmem [resolvable:$true] %s154
          %160 = dma.hbm_to_vmem [thread:$0]  %s153, 2048, %s155, %s143, 128, 128, 8
        $region20: #{tpu_custom_call.1} parent=15 // pred_fallthru
          _
        // Predicated region
        $region21: #{tpu_custom_call.1} parent=15 // pred_check
          %p161 = pneg %p86
        $region22: #{tpu_custom_call.1} parent=15 // pred_check_branch
          %163 = sbr.rel (%p161) target = $region24
        $region23: #{tpu_custom_call.1} parent=15 // pred_region
          %s164 = sand.u32 %s76, 1
          %s165 = scalar_lea.sflag [#allocation7], %s164
          %s166 = sand.u32 %s76, 1
          %s167 = smul.addr %s166, 32
          %s168 = scalar_lea.vmem [#allocation6], %s167
          %s169 = sadd.s32 %s25, %s26
          %s170 = smul.u32 4, %s24
          %172 = vsyncadd %s165, 0
          %s173 = smul.addr %s170, 2
          %s174 = sadd.s32 %s169, %s173
          %s175 = smul.addr %s174, 8
          %s176 = scalar_lea.hbm %s1, %s175
          %s177 = sshll.u32 %s176, 4
          %s178 = int_to_ptr.hbm [resolvable:$true] %s177
          %s179 = sshll.u32 %s168, 4
          %s180 = int_to_ptr.vmem [resolvable:$true] %s179
          %185 = dma.hbm_to_vmem [thread:$0]  %s178, 512, %s180, %s165, 256, 128, 8
        $region24: #{tpu_custom_call.1} parent=15 // pred_fallthru
          _
      $region16: #{tpu_custom_call.1} parent=5 // pred_fallthru
        _
      %p186 = scmp.le.s32.totalorder 1, %s17
      %p187 = scmp.lt.s32.totalorder %s17, 5
      %p188 = pnand %p186, %p187
      %p189 = pneg %p188
      // Predicated region
      $region25: #{tpu_custom_call.1} parent=5 // pred_check
        _
      $region26: #{tpu_custom_call.1} parent=5 // pred_check_branch
        %191 = sbr.rel (%p188) target = $region28
      $region27: #{tpu_custom_call.1} parent=5 // pred_region
        %s192 = ssub.s32 %s17, 1
        %s193 = sand.u32 %s49, 1
        %s194 = scalar_lea.sflag [#allocation4], %s193
        %s195 = sand.u32 %s49, 1
        %s196 = smul.addr %s195, 128
        %s197 = scalar_lea.vmem [#allocation3], %s196
        // Predicated region
        $region29: #{tpu_custom_call.1} parent=27 // pred_check
          %p198 = pneg %p62
        $region30: #{tpu_custom_call.1} parent=27 // pred_check_branch
          %200 = sbr.rel (%p198) target = $region32
        $region31: #{tpu_custom_call.1} parent=27 // pred_region
          %202 = dma.done %s194, 2048
        $region32: #{tpu_custom_call.1} parent=27 // pred_fallthru
          _
        %s203 = sand.u32 %s79, 1
        %s204 = scalar_lea.sflag [#allocation7], %s203
        %s205 = sand.u32 %s79, 1
        %s206 = smul.addr %s205, 32
        %s207 = scalar_lea.vmem [#allocation6], %s206
        // Predicated region
        $region33: #{tpu_custom_call.1} parent=27 // pred_check
          %p208 = pneg %p92
        $region34: #{tpu_custom_call.1} parent=27 // pred_check_branch
          %210 = sbr.rel (%p208) target = $region36
        $region35: #{tpu_custom_call.1} parent=27 // pred_region
          %212 = dma.done %s204, 512
        $region36: #{tpu_custom_call.1} parent=27 // pred_fallthru
          _
        %s213 = sand.u32 %s49, 1
        %s214 = scalar_lea.sflag [#allocation4], %s213
        %s215 = sand.u32 %s49, 1
        %s216 = smul.addr %s215, 128
        %s217 = scalar_lea.vmem [#allocation3], %s216
        %p218 = pneg %p62
        %p219 = pneg %p59
        %s220 = sand.u32 %s79, 1
        %s221 = scalar_lea.sflag [#allocation7], %s220
        %s222 = sand.u32 %s79, 1
        %s223 = smul.addr %s222, 32
        %s224 = scalar_lea.vmem [#allocation6], %s223
        %p225 = pneg %p92
        %p226 = pneg %p89
        %p227 = pneg %p120
        %p228 = pneg %p117
        %s229 = sand.u32 %s107, 1
        %s230 = scalar_lea.sflag [#allocation5], %s229
        %s231 = sand.u32 %s107, 1
        %s232 = smul.addr %s231, 32
        %s233 = scalar_lea.vmem [#allocation8], %s232
        %s234 = smul.u32 16, %s29
        %s235 = sadd.s32 %s28, %s29
        %s236 = smul.u32 4, %s27
        %s237 = smul.u32 4, %s27
        %p238 = scmp.eq.s32.totalorder %s29, 0
        // Predicated region
        $region37: #{tpu_custom_call.1} parent=27 // pred_check
          %p239 = pneg %p238
        $region38: #{tpu_custom_call.1} parent=27 // pred_check_branch
          %241 = sbr.rel (%p239) target = $region40
        $region39: #{tpu_custom_call.1} parent=27 // pred_region
          %242 = vst [vmem:[#allocation2] sm:$0xff] 0.0
          %243 = vst [vmem:[#allocation2 + $0x8] sm:$0xff] 0.0
          %244 = vst [vmem:[#allocation2 + $0x10] sm:$0xff] 0.0
          %245 = vst [vmem:[#allocation2 + $0x18] sm:$0xff] 0.0
        $region40: #{tpu_custom_call.1} parent=27 // pred_fallthru
          _
        %v246 = vld [vmem:[#allocation2] sm:$0xff]
        %v247 = vld [vmem:[#allocation2 + $0x8] sm:$0xff]
        %v248 = vld [vmem:[#allocation2 + $0x10] sm:$0xff]
        %v249 = vld [vmem:[#allocation2 + $0x18] sm:$0xff]
        %v250 = vld [vmem:[%s207] sm:$0xff]
        %v251 = vld [vmem:[%s207 + $0x8] sm:$0xff]
        %v252 = vld [vmem:[%s207 + $0x10] sm:$0xff]
        %v253 = vld [vmem:[%s207 + $0x18] sm:$0xff]
        %v254 = vld [vmem:[%s197] sm:$0xff]
        %v255 = vld [vmem:[%s197 + $0x8] sm:$0xff]
        %v256 = vld [vmem:[%s197 + $0x10] sm:$0xff]
        %v257 = vld [vmem:[%s197 + $0x18] sm:$0xff]
        %v258 = vld [vmem:[%s197 + $0x20] sm:$0xff]
        %v259 = vld [vmem:[%s197 + $0x28] sm:$0xff]
        %v260 = vld [vmem:[%s197 + $0x30] sm:$0xff]
        %v261 = vld [vmem:[%s197 + $0x38] sm:$0xff]
        %v262 = vld [vmem:[%s197 + $0x40] sm:$0xff]
        %v263 = vld [vmem:[%s197 + $0x48] sm:$0xff]
        %v264 = vld [vmem:[%s197 + $0x50] sm:$0xff]
        %v265 = vld [vmem:[%s197 + $0x58] sm:$0xff]
        %v266 = vld [vmem:[%s197 + $0x60] sm:$0xff]
        %v267 = vld [vmem:[%s197 + $0x68] sm:$0xff]
        %v268 = vld [vmem:[%s197 + $0x70] sm:$0xff]
        %v269 = vld [vmem:[%s197 + $0x78] sm:$0xff]
        %v270 = vand.u32 %v269, 4294901760
        %271 = vmatpush.msra.mxu0 %v270
        %v272 = vand.u32 %v268, 4294901760
        %273 = vmatpush.msra.mxu0 %v272
        %v274 = vand.u32 %v267, 4294901760
        %275 = vmatpush.msra.mxu0 %v274
        %v276 = vand.u32 %v266, 4294901760
        %277 = vmatpush.msra.mxu0 %v276
        %v278 = vand.u32 %v265, 4294901760
        %279 = vmatpush.msra.mxu0 %v278
        %v280 = vand.u32 %v264, 4294901760
        %281 = vmatpush.msra.mxu0 %v280
        %v282 = vand.u32 %v263, 4294901760
        %283 = vmatpush.msra.mxu0 %v282
        %v284 = vand.u32 %v262, 4294901760
        %285 = vmatpush.msra.mxu0 %v284
        %v286 = vand.u32 %v261, 4294901760
        %287 = vmatpush.msra.mxu0 %v286
        %v288 = vand.u32 %v260, 4294901760
        %289 = vmatpush.msra.mxu0 %v288
        %v290 = vand.u32 %v259, 4294901760
        %291 = vmatpush.msra.mxu0 %v290
        %v292 = vand.u32 %v258, 4294901760
        %293 = vmatpush.msra.mxu0 %v292
        %v294 = vand.u32 %v257, 4294901760
        %295 = vmatpush.msra.mxu0 %v294
        %v296 = vand.u32 %v256, 4294901760
        %297 = vmatpush.msra.mxu0 %v296
        %v298 = vand.u32 %v255, 4294901760
        %299 = vmatpush.msra.mxu0 %v298
        %v300 = vand.u32 %v254, 4294901760
        %301 = vmatpush.msra.mxu0 %v300
        %v302 = vand.u32 %v250, 4294901760
        %v303 = vsub.f32 %v250, %v302
        %v304 = vand.u32 %v303, 4294901760
        %v305 = vsub.f32 %v303, %v304
        %v306 = vand.u32 %v305, 4294901760
        %307 = vmatmul.f32.gmra.mxu0 %v306
        %v308 = vpop.f32.mrf.mxu0
        %v309 = vadd.f32 0.0, %v308
        %v310 = vand.u32 %v251, 4294901760
        %v311 = vsub.f32 %v251, %v310
        %v312 = vand.u32 %v311, 4294901760
        %v313 = vsub.f32 %v311, %v312
        %v314 = vand.u32 %v313, 4294901760
        %315 = vmatmul.f32.gmra.mxu0 %v314
        %v316 = vpop.f32.mrf.mxu0
        %v317 = vadd.f32 0.0, %v316
        %v318 = vand.u32 %v252, 4294901760
        %v319 = vsub.f32 %v252, %v318
        %v320 = vand.u32 %v319, 4294901760
        %v321 = vsub.f32 %v319, %v320
        %v322 = vand.u32 %v321, 4294901760
        %323 = vmatmul.f32.gmra.mxu0 %v322
        %v324 = vpop.f32.mrf.mxu0
        %v325 = vadd.f32 0.0, %v324
        %v326 = vand.u32 %v253, 4294901760
        %v327 = vsub.f32 %v253, %v326
        %v328 = vand.u32 %v327, 4294901760
        %v329 = vsub.f32 %v327, %v328
        %v330 = vand.u32 %v329, 4294901760
        %331 = vmatmul.f32.gmra.mxu0 %v330
        %v332 = vpop.f32.mrf.mxu0
        %v333 = vadd.f32 0.0, %v332
        %334 = vdwg.mxu0
        %v335 = vand.u32 %v269, 4294901760
        %v336 = vsub.f32 %v269, %v335
        %v337 = vand.u32 %v336, 4294901760
        %v338 = vsub.f32 %v336, %v337
        %v339 = vand.u32 %v338, 4294901760
        %340 = vmatpush.msra.mxu0 %v339
        %v341 = vand.u32 %v268, 4294901760
        %v342 = vsub.f32 %v268, %v341
        %v343 = vand.u32 %v342, 4294901760
        %v344 = vsub.f32 %v342, %v343
        %v345 = vand.u32 %v344, 4294901760
        %346 = vmatpush.msra.mxu0 %v345
        %v347 = vand.u32 %v267, 4294901760
        %v348 = vsub.f32 %v267, %v347
        %v349 = vand.u32 %v348, 4294901760
        %v350 = vsub.f32 %v348, %v349
        %v351 = vand.u32 %v350, 4294901760
        %352 = vmatpush.msra.mxu0 %v351
        %v353 = vand.u32 %v266, 4294901760
        %v354 = vsub.f32 %v266, %v353
        %v355 = vand.u32 %v354, 4294901760
        %v356 = vsub.f32 %v354, %v355
        %v357 = vand.u32 %v356, 4294901760
        %358 = vmatpush.msra.mxu0 %v357
        %v359 = vand.u32 %v265, 4294901760
        %v360 = vsub.f32 %v265, %v359
        %v361 = vand.u32 %v360, 4294901760
        %v362 = vsub.f32 %v360, %v361
        %v363 = vand.u32 %v362, 4294901760
        %364 = vmatpush.msra.mxu0 %v363
        %v365 = vand.u32 %v264, 4294901760
        %v366 = vsub.f32 %v264, %v365
        %v367 = vand.u32 %v366, 4294901760
        %v368 = vsub.f32 %v366, %v367
        %v369 = vand.u32 %v368, 4294901760
        %370 = vmatpush.msra.mxu0 %v369
        %v371 = vand.u32 %v263, 4294901760
        %v372 = vsub.f32 %v263, %v371
        %v373 = vand.u32 %v372, 4294901760
        %v374 = vsub.f32 %v372, %v373
        %v375 = vand.u32 %v374, 4294901760
        %376 = vmatpush.msra.mxu0 %v375
        %v377 = vand.u32 %v262, 4294901760
        %v378 = vsub.f32 %v262, %v377
        %v379 = vand.u32 %v378, 4294901760
        %v380 = vsub.f32 %v378, %v379
        %v381 = vand.u32 %v380, 4294901760
        %382 = vmatpush.msra.mxu0 %v381
        %v383 = vand.u32 %v261, 4294901760
        %v384 = vsub.f32 %v261, %v383
        %v385 = vand.u32 %v384, 4294901760
        %v386 = vsub.f32 %v384, %v385
        %v387 = vand.u32 %v386, 4294901760
        %388 = vmatpush.msra.mxu0 %v387
        %v389 = vand.u32 %v260, 4294901760
        %v390 = vsub.f32 %v260, %v389
        %v391 = vand.u32 %v390, 4294901760
        %v392 = vsub.f32 %v390, %v391
        %v393 = vand.u32 %v392, 4294901760
        %394 = vmatpush.msra.mxu0 %v393
        %v395 = vand.u32 %v259, 4294901760
        %v396 = vsub.f32 %v259, %v395
        %v397 = vand.u32 %v396, 4294901760
        %v398 = vsub.f32 %v396, %v397
        %v399 = vand.u32 %v398, 4294901760
        %400 = vmatpush.msra.mxu0 %v399
        %v401 = vand.u32 %v258, 4294901760
        %v402 = vsub.f32 %v258, %v401
        %v403 = vand.u32 %v402, 4294901760
        %v404 = vsub.f32 %v402, %v403
        %v405 = vand.u32 %v404, 4294901760
        %406 = vmatpush.msra.mxu0 %v405
        %v407 = vand.u32 %v257, 4294901760
        %v408 = vsub.f32 %v257, %v407
        %v409 = vand.u32 %v408, 4294901760
        %v410 = vsub.f32 %v408, %v409
        %v411 = vand.u32 %v410, 4294901760
        %412 = vmatpush.msra.mxu0 %v411
        %v413 = vand.u32 %v256, 4294901760
        %v414 = vsub.f32 %v256, %v413
        %v415 = vand.u32 %v414, 4294901760
        %v416 = vsub.f32 %v414, %v415
        %v417 = vand.u32 %v416, 4294901760
        %418 = vmatpush.msra.mxu0 %v417
        %v419 = vand.u32 %v255, 4294901760
        %v420 = vsub.f32 %v255, %v419
        %v421 = vand.u32 %v420, 4294901760
        %v422 = vsub.f32 %v420, %v421
        %v423 = vand.u32 %v422, 4294901760
        %424 = vmatpush.msra.mxu0 %v423
        %v425 = vand.u32 %v254, 4294901760
        %v426 = vsub.f32 %v254, %v425
        %v427 = vand.u32 %v426, 4294901760
        %v428 = vsub.f32 %v426, %v427
        %v429 = vand.u32 %v428, 4294901760
        %430 = vmatpush.msra.mxu0 %v429
        %v431 = vand.u32 %v250, 4294901760
        %432 = vmatmul.f32.gmra.mxu0 %v431
        %v433 = vpop.f32.mrf.mxu0
        %v434 = vadd.f32 %v309, %v433
        %v435 = vand.u32 %v251, 4294901760
        %436 = vmatmul.f32.gmra.mxu0 %v435
        %v437 = vpop.f32.mrf.mxu0
        %v438 = vadd.f32 %v317, %v437
        %v439 = vand.u32 %v252, 4294901760
        %440 = vmatmul.f32.gmra.mxu0 %v439
        %v441 = vpop.f32.mrf.mxu0
        %v442 = vadd.f32 %v325, %v441
        %v443 = vand.u32 %v253, 4294901760
        %444 = vmatmul.f32.gmra.mxu0 %v443
        %v445 = vpop.f32.mrf.mxu0
        %v446 = vadd.f32 %v333, %v445
        %447 = vdwg.mxu0
        %v448 = vand.u32 %v269, 4294901760
        %v449 = vsub.f32 %v269, %v448
        %450 = vmatpush.msra.mxu0 %v449
        %v451 = vand.u32 %v268, 4294901760
        %v452 = vsub.f32 %v268, %v451
        %453 = vmatpush.msra.mxu0 %v452
        %v454 = vand.u32 %v267, 4294901760
        %v455 = vsub.f32 %v267, %v454
        %456 = vmatpush.msra.mxu0 %v455
        %v457 = vand.u32 %v266, 4294901760
        %v458 = vsub.f32 %v266, %v457
        %459 = vmatpush.msra.mxu0 %v458
        %v460 = vand.u32 %v265, 4294901760
        %v461 = vsub.f32 %v265, %v460
        %462 = vmatpush.msra.mxu0 %v461
        %v463 = vand.u32 %v264, 4294901760
        %v464 = vsub.f32 %v264, %v463
        %465 = vmatpush.msra.mxu0 %v464
        %v466 = vand.u32 %v263, 4294901760
        %v467 = vsub.f32 %v263, %v466
        %468 = vmatpush.msra.mxu0 %v467
        %v469 = vand.u32 %v262, 4294901760
        %v470 = vsub.f32 %v262, %v469
        %471 = vmatpush.msra.mxu0 %v470
        %v472 = vand.u32 %v261, 4294901760
        %v473 = vsub.f32 %v261, %v472
        %474 = vmatpush.msra.mxu0 %v473
        %v475 = vand.u32 %v260, 4294901760
        %v476 = vsub.f32 %v260, %v475
        %477 = vmatpush.msra.mxu0 %v476
        %v478 = vand.u32 %v259, 4294901760
        %v479 = vsub.f32 %v259, %v478
        %480 = vmatpush.msra.mxu0 %v479
        %v481 = vand.u32 %v258, 4294901760
        %v482 = vsub.f32 %v258, %v481
        %483 = vmatpush.msra.mxu0 %v482
        %v484 = vand.u32 %v257, 4294901760
        %v485 = vsub.f32 %v257, %v484
        %486 = vmatpush.msra.mxu0 %v485
        %v487 = vand.u32 %v256, 4294901760
        %v488 = vsub.f32 %v256, %v487
        %489 = vmatpush.msra.mxu0 %v488
        %v490 = vand.u32 %v255, 4294901760
        %v491 = vsub.f32 %v255, %v490
        %492 = vmatpush.msra.mxu0 %v491
        %v493 = vand.u32 %v254, 4294901760
        %v494 = vsub.f32 %v254, %v493
        %495 = vmatpush.msra.mxu0 %v494
        %v496 = vand.u32 %v250, 4294901760
        %v497 = vsub.f32 %v250, %v496
        %498 = vmatmul.f32.gmra.mxu0 %v497
        %v499 = vpop.f32.mrf.mxu0
        %v500 = vadd.f32 %v434, %v499
        %v501 = vand.u32 %v251, 4294901760
        %v502 = vsub.f32 %v251, %v501
        %503 = vmatmul.f32.gmra.mxu0 %v502
        %v504 = vpop.f32.mrf.mxu0
        %v505 = vadd.f32 %v438, %v504
        %v506 = vand.u32 %v252, 4294901760
        %v507 = vsub.f32 %v252, %v506
        %508 = vmatmul.f32.gmra.mxu0 %v507
        %v509 = vpop.f32.mrf.mxu0
        %v510 = vadd.f32 %v442, %v509
        %v511 = vand.u32 %v253, 4294901760
        %v512 = vsub.f32 %v253, %v511
        %513 = vmatmul.f32.gmra.mxu0 %v512
        %v514 = vpop.f32.mrf.mxu0
        %v515 = vadd.f32 %v446, %v514
        %516 = vdwg.mxu0
        %v517 = vand.u32 %v269, 4294901760
        %518 = vmatpush.msra.mxu0 %v517
        %v519 = vand.u32 %v268, 4294901760
        %520 = vmatpush.msra.mxu0 %v519
        %v521 = vand.u32 %v267, 4294901760
        %522 = vmatpush.msra.mxu0 %v521
        %v523 = vand.u32 %v266, 4294901760
        %524 = vmatpush.msra.mxu0 %v523
        %v525 = vand.u32 %v265, 4294901760
        %526 = vmatpush.msra.mxu0 %v525
        %v527 = vand.u32 %v264, 4294901760
        %528 = vmatpush.msra.mxu0 %v527
        %v529 = vand.u32 %v263, 4294901760
        %530 = vmatpush.msra.mxu0 %v529
        %v531 = vand.u32 %v262, 4294901760
        %532 = vmatpush.msra.mxu0 %v531
        %v533 = vand.u32 %v261, 4294901760
        %534 = vmatpush.msra.mxu0 %v533
        %v535 = vand.u32 %v260, 4294901760
        %536 = vmatpush.msra.mxu0 %v535
        %v537 = vand.u32 %v259, 4294901760
        %538 = vmatpush.msra.mxu0 %v537
        %v539 = vand.u32 %v258, 4294901760
        %540 = vmatpush.msra.mxu0 %v539
        %v541 = vand.u32 %v257, 4294901760
        %542 = vmatpush.msra.mxu0 %v541
        %v543 = vand.u32 %v256, 4294901760
        %544 = vmatpush.msra.mxu0 %v543
        %v545 = vand.u32 %v255, 4294901760
        %546 = vmatpush.msra.mxu0 %v545
        %v547 = vand.u32 %v254, 4294901760
        %548 = vmatpush.msra.mxu0 %v547
        %v549 = vand.u32 %v250, 4294901760
        %v550 = vsub.f32 %v250, %v549
        %v551 = vand.u32 %v550, 4294901760
        %552 = vmatmul.f32.gmra.mxu0 %v551
        %v553 = vpop.f32.mrf.mxu0
        %v554 = vadd.f32 %v500, %v553
        %v555 = vand.u32 %v251, 4294901760
        %v556 = vsub.f32 %v251, %v555
        %v557 = vand.u32 %v556, 4294901760
        %558 = vmatmul.f32.gmra.mxu0 %v557
        %v559 = vpop.f32.mrf.mxu0
        %v560 = vadd.f32 %v505, %v559
        %v561 = vand.u32 %v252, 4294901760
        %v562 = vsub.f32 %v252, %v561
        %v563 = vand.u32 %v562, 4294901760
        %564 = vmatmul.f32.gmra.mxu0 %v563
        %v565 = vpop.f32.mrf.mxu0
        %v566 = vadd.f32 %v510, %v565
        %v567 = vand.u32 %v253, 4294901760
        %v568 = vsub.f32 %v253, %v567
        %v569 = vand.u32 %v568, 4294901760
        %570 = vmatmul.f32.gmra.mxu0 %v569
        %v571 = vpop.f32.mrf.mxu0
        %v572 = vadd.f32 %v515, %v571
        %573 = vdwg.mxu0
        %v574 = vand.u32 %v269, 4294901760
        %v575 = vsub.f32 %v269, %v574
        %v576 = vand.u32 %v575, 4294901760
        %577 = vmatpush.msra.mxu0 %v576
        %v578 = vand.u32 %v268, 4294901760
        %v579 = vsub.f32 %v268, %v578
        %v580 = vand.u32 %v579, 4294901760
        %581 = vmatpush.msra.mxu0 %v580
        %v582 = vand.u32 %v267, 4294901760
        %v583 = vsub.f32 %v267, %v582
        %v584 = vand.u32 %v583, 4294901760
        %585 = vmatpush.msra.mxu0 %v584
        %v586 = vand.u32 %v266, 4294901760
        %v587 = vsub.f32 %v266, %v586
        %v588 = vand.u32 %v587, 4294901760
        %589 = vmatpush.msra.mxu0 %v588
        %v590 = vand.u32 %v265, 4294901760
        %v591 = vsub.f32 %v265, %v590
        %v592 = vand.u32 %v591, 4294901760
        %593 = vmatpush.msra.mxu0 %v592
        %v594 = vand.u32 %v264, 4294901760
        %v595 = vsub.f32 %v264, %v594
        %v596 = vand.u32 %v595, 4294901760
        %597 = vmatpush.msra.mxu0 %v596
        %v598 = vand.u32 %v263, 4294901760
        %v599 = vsub.f32 %v263, %v598
        %v600 = vand.u32 %v599, 4294901760
        %601 = vmatpush.msra.mxu0 %v600
        %v602 = vand.u32 %v262, 4294901760
        %v603 = vsub.f32 %v262, %v602
        %v604 = vand.u32 %v603, 4294901760
        %605 = vmatpush.msra.mxu0 %v604
        %v606 = vand.u32 %v261, 4294901760
        %v607 = vsub.f32 %v261, %v606
        %v608 = vand.u32 %v607, 4294901760
        %609 = vmatpush.msra.mxu0 %v608
        %v610 = vand.u32 %v260, 4294901760
        %v611 = vsub.f32 %v260, %v610
        %v612 = vand.u32 %v611, 4294901760
        %613 = vmatpush.msra.mxu0 %v612
        %v614 = vand.u32 %v259, 4294901760
        %v615 = vsub.f32 %v259, %v614
        %v616 = vand.u32 %v615, 4294901760
        %617 = vmatpush.msra.mxu0 %v616
        %v618 = vand.u32 %v258, 4294901760
        %v619 = vsub.f32 %v258, %v618
        %v620 = vand.u32 %v619, 4294901760
        %621 = vmatpush.msra.mxu0 %v620
        %v622 = vand.u32 %v257, 4294901760
        %v623 = vsub.f32 %v257, %v622
        %v624 = vand.u32 %v623, 4294901760
        %625 = vmatpush.msra.mxu0 %v624
        %v626 = vand.u32 %v256, 4294901760
        %v627 = vsub.f32 %v256, %v626
        %v628 = vand.u32 %v627, 4294901760
        %629 = vmatpush.msra.mxu0 %v628
        %v630 = vand.u32 %v255, 4294901760
        %v631 = vsub.f32 %v255, %v630
        %v632 = vand.u32 %v631, 4294901760
        %633 = vmatpush.msra.mxu0 %v632
        %v634 = vand.u32 %v254, 4294901760
        %v635 = vsub.f32 %v254, %v634
        %v636 = vand.u32 %v635, 4294901760
        %637 = vmatpush.msra.mxu0 %v636
        %v638 = vand.u32 %v250, 4294901760
        %639 = vmatmul.f32.gmra.mxu0 %v638
        %v640 = vpop.f32.mrf.mxu0
        %v641 = vadd.f32 %v554, %v640
        %v642 = vand.u32 %v251, 4294901760
        %643 = vmatmul.f32.gmra.mxu0 %v642
        %v644 = vpop.f32.mrf.mxu0
        %v645 = vadd.f32 %v560, %v644
        %v646 = vand.u32 %v252, 4294901760
        %647 = vmatmul.f32.gmra.mxu0 %v646
        %v648 = vpop.f32.mrf.mxu0
        %v649 = vadd.f32 %v566, %v648
        %v650 = vand.u32 %v253, 4294901760
        %651 = vmatmul.f32.gmra.mxu0 %v650
        %v652 = vpop.f32.mrf.mxu0
        %v653 = vadd.f32 %v572, %v652
        %654 = vdwg.mxu0
        %v655 = vand.u32 %v269, 4294901760
        %656 = vmatpush.msra.mxu0 %v655
        %v657 = vand.u32 %v268, 4294901760
        %658 = vmatpush.msra.mxu0 %v657
        %v659 = vand.u32 %v267, 4294901760
        %660 = vmatpush.msra.mxu0 %v659
        %v661 = vand.u32 %v266, 4294901760
        %662 = vmatpush.msra.mxu0 %v661
        %v663 = vand.u32 %v265, 4294901760
        %664 = vmatpush.msra.mxu0 %v663
        %v665 = vand.u32 %v264, 4294901760
        %666 = vmatpush.msra.mxu0 %v665
        %v667 = vand.u32 %v263, 4294901760
        %668 = vmatpush.msra.mxu0 %v667
        %v669 = vand.u32 %v262, 4294901760
        %670 = vmatpush.msra.mxu0 %v669
        %v671 = vand.u32 %v261, 4294901760
        %672 = vmatpush.msra.mxu0 %v671
        %v673 = vand.u32 %v260, 4294901760
        %674 = vmatpush.msra.mxu0 %v673
        %v675 = vand.u32 %v259, 4294901760
        %676 = vmatpush.msra.mxu0 %v675
        %v677 = vand.u32 %v258, 4294901760
        %678 = vmatpush.msra.mxu0 %v677
        %v679 = vand.u32 %v257, 4294901760
        %680 = vmatpush.msra.mxu0 %v679
        %v681 = vand.u32 %v256, 4294901760
        %682 = vmatpush.msra.mxu0 %v681
        %v683 = vand.u32 %v255, 4294901760
        %684 = vmatpush.msra.mxu0 %v683
        %v685 = vand.u32 %v254, 4294901760
        %686 = vmatpush.msra.mxu0 %v685
        %v687 = vand.u32 %v250, 4294901760
        %688 = vmatmul.f32.gmra.mxu0 %v687
        %v689 = vpop.f32.mrf.mxu0
        %v690 = vadd.f32 %v641, %v689
        %v691 = vand.u32 %v251, 4294901760
        %692 = vmatmul.f32.gmra.mxu0 %v691
        %v693 = vpop.f32.mrf.mxu0
        %v694 = vadd.f32 %v645, %v693
        %v695 = vand.u32 %v252, 4294901760
        %696 = vmatmul.f32.gmra.mxu0 %v695
        %v697 = vpop.f32.mrf.mxu0
        %v698 = vadd.f32 %v649, %v697
        %v699 = vand.u32 %v253, 4294901760
        %700 = vmatmul.f32.gmra.mxu0 %v699
        %v701 = vpop.f32.mrf.mxu0
        %v702 = vadd.f32 %v653, %v701
        %703 = vdwg.mxu0
        %v704 = vadd.f32 %v246, %v690
        %v705 = vadd.f32 %v247, %v694
        %v706 = vadd.f32 %v248, %v698
        %v707 = vadd.f32 %v249, %v702
        %708 = vst [vmem:[#allocation2] sm:$0xff] %v704
        %709 = vst [vmem:[#allocation2 + $0x8] sm:$0xff] %v705
        %710 = vst [vmem:[#allocation2 + $0x10] sm:$0xff] %v706
        %711 = vst [vmem:[#allocation2 + $0x18] sm:$0xff] %v707
        %p712 = scmp.eq.s32.totalorder %s29, 1
        // Predicated region
        $region41: #{tpu_custom_call.1} parent=27 // pred_check
          %p713 = pneg %p712
        $region42: #{tpu_custom_call.1} parent=27 // pred_check_branch
          %715 = sbr.rel (%p713) target = $region44
        $region43: #{tpu_custom_call.1} parent=27 // pred_region
          %v716 = vld [vmem:[#allocation2] sm:$0xff]
          %v717 = vld [vmem:[#allocation2 + $0x8] sm:$0xff]
          %v718 = vld [vmem:[#allocation2 + $0x10] sm:$0xff]
          %v719 = vld [vmem:[#allocation2 + $0x18] sm:$0xff]
          %v720 = vmul.f32 %v716, 0.2
          %v721 = vmul.f32 %v717, 0.2
          %v722 = vmul.f32 %v718, 0.2
          %v723 = vmul.f32 %v719, 0.2
          %724 = vst [vmem:[%s233] sm:$0xff] %v720
          %725 = vst [vmem:[%s233 + $0x8] sm:$0xff] %v721
          %726 = vst [vmem:[%s233 + $0x10] sm:$0xff] %v722
          %727 = vst [vmem:[%s233 + $0x18] sm:$0xff] %v723
        $region44: #{tpu_custom_call.1} parent=27 // pred_fallthru
          _
        %s728 = sand.u32 %s107, 1
        %s729 = scalar_lea.sflag [#allocation5], %s728
        %s730 = sand.u32 %s107, 1
        %s731 = smul.addr %s730, 32
        %s732 = scalar_lea.vmem [#allocation8], %s731
        // Predicated region
        $region45: #{tpu_custom_call.1} parent=27 // pred_check
          %p733 = pneg %p117
        $region46: #{tpu_custom_call.1} parent=27 // pred_check_branch
          %735 = sbr.rel (%p733) target = $region48
        $region47: #{tpu_custom_call.1} parent=27 // pred_region
          %s736 = smul.u32 4, %s27
          %738 = vsyncadd %s729, 0
          %s739 = sadd.s32 %s28, %s736
          %s740 = smul.addr %s739, 8
          %s741 = scalar_lea.hbm %s2, %s740
          %s742 = sshll.u32 %s732, 4
          %s743 = int_to_ptr.vmem [resolvable:$true] %s742
          %s744 = sshll.u32 %s741, 4
          %s745 = int_to_ptr.hbm [resolvable:$true] %s744
          %750 = dma.vmem_to_hbm [thread:$0]  %s743, 512, %s745, %s729, 128, 128, 8
        $region48: #{tpu_custom_call.1} parent=27 // pred_fallthru
          _
      $region28: #{tpu_custom_call.1} parent=5 // pred_fallthru
        _
      %p751 = scmp.le.s32.totalorder 2, %s17
      // Predicated region
      $region49: #{tpu_custom_call.1} parent=5 // pred_check
        %p752 = pneg %p751
      $region50: #{tpu_custom_call.1} parent=5 // pred_check_branch
        %754 = sbr.rel (%p752) target = $region52
      $region51: #{tpu_custom_call.1} parent=5 // pred_region
        %s755 = ssub.s32 %s17, 2
        // Predicated region
        $region53: #{tpu_custom_call.1} parent=51 // pred_check
          %p756 = pneg %p123
        $region54: #{tpu_custom_call.1} parent=51 // pred_check_branch
          %758 = sbr.rel (%p756) target = $region56
        $region55: #{tpu_custom_call.1} parent=51 // pred_region
          %s759 = sand.u32 %s108, 1
          %s760 = scalar_lea.sflag [#allocation5], %s759
          %s761 = sand.u32 %s108, 1
          %s762 = smul.addr %s761, 32
          %s763 = scalar_lea.vmem [#allocation8], %s762
          %765 = dma.done %s760, 512
        $region56: #{tpu_custom_call.1} parent=51 // pred_fallthru
          _
      $region52: #{tpu_custom_call.1} parent=5 // pred_fallthru
        _
    $region6: #{tpu_custom_call.1} parent=1 // loop_footer
      %s21 = sadd.s32 1, %s17
    $region7: #{tpu_custom_call.1} parent=1 // loop_footer_branch
      %16 = sbr.rel target = $region3
    $region8: #{tpu_custom_call.1} parent=1 // loop_exit
      _
    %766 = vsyncpa [#allocation4], 1
    %s767 = scalar_lea.sflag [#allocation4], 1
    %768 = vsyncpa %s767, 1
    %769 = vsyncpa [#allocation7], 1
    %s770 = scalar_lea.sflag [#allocation7], 1
    %771 = vsyncpa %s770, 1
    %772 = vsyncpa [#allocation5], 1
    %s773 = scalar_lea.sflag [#allocation5], 1
    %774 = vsyncpa %s773, 1

</llo_original>
